<compile_context>
chip_gen: v7x
topology: tpu7x:2x2x1
jax: 0.10.0
libtpu: 0.0.40
codegen_flags: <defaults>
</compile_context>

<pallas_src>
import functools

import jax
import jax.numpy as jnp
from jax.experimental import pallas as pl
from jax.experimental.pallas import tpu as pltpu

# Reference model uses _MODEL_DIM = 10000; the demo runs a small synthetic dim.
MODEL_DIM = 256
BATCH = 8
DROPOUT_P = 0.5

_MAX_BATCH_TILE = 256


def _round_up(v, m):
    return ((v + m - 1) // m) * m


def _device_tiling():
    """Generation-aware lane-tile cap / VMEM budget.

    128 MiB VMEM (v5e/v6e): tn up to 1024 -> bf16 full-K weight tile ~20 MB (x2 buffers).
    64 MiB VMEM  (v7x)    : tn up to 512  -> ~10 MB tile, double-buffer stays < ~24 MB.
    """
    try:
        vmem = int(pltpu.get_tpu_info().vmem_capacity_bytes)
    except Exception:
        vmem = 64 * 1024 * 1024  # conservative (v7x-sized) fallback
    if vmem >= 100 * 1024 * 1024:
        return 1024, 96 * 1024 * 1024
    return 512, 40 * 1024 * 1024


_LANE_TILE_CAP, _VMEM_LIMIT_BYTES = _device_tiling()


def _pad_feature_dim(d):
    """Pad a feature dim to a multiple of the lane tile (itself a multiple of 128)."""
    d_pad = _round_up(d, 128)
    tn = min(d_pad, _LANE_TILE_CAP)
    return _round_up(d_pad, tn)


def _padded_batch(m):
    m_pad = _round_up(m, 8)
    if m_pad > _MAX_BATCH_TILE:
        m_pad = _round_up(m_pad, _MAX_BATCH_TILE)
    return m_pad


def _keep_threshold(p):
    # bits ~ uniform int32; keep iff bits >= t with t = (2p-1)*2^31 -> P(keep) = 1-p.
    t = int(round((2.0 * p - 1.0) * (2 ** 31)))
    return max(-(2 ** 31), min(t, 2 ** 31 - 1))


# ----------------------------- kernels ------------------------------------ #
def _linear_relu_kernel(x_ref, w_ref, o_ref):
    """o = relu(x @ w); full-K contraction in one step (no reduction grid axis)."""
    acc = jnp.dot(x_ref[...], w_ref[...], preferred_element_type=jnp.float32)
    o_ref[...] = jnp.maximum(acc, 0.0).astype(o_ref.dtype)


def _linear_dropout_kernel(x_ref, w_ref, bits_ref, o_ref, *, keep_threshold, scale):
    """o = dropout(x @ w, p); bits_ref holds uniform int32 random bits for this tile."""
    acc = jnp.dot(x_ref[...], w_ref[...], preferred_element_type=jnp.float32)
    keep = bits_ref[...] >= jnp.int32(keep_threshold)
    o_ref[...] = jnp.where(keep, acc * jnp.float32(scale), 0.0).astype(o_ref.dtype)


# ----------------------------- wrapper ------------------------------------ #
def _fused_linear(x, wt, bits=None, p=DROPOUT_P, out_dtype=jnp.bfloat16):
    """out = epilogue(x @ wt) where wt is the pre-transposed, padded (in, out) weight.

    x: (M, K) bf16, wt: (K, N) bf16, bits: optional (M, N) int32.
    bits is None -> fused ReLU; else -> fused training-mode dropout(p).
    Shapes must already be padded to tile multiples.
    """
    M, K = x.shape
    K2, N = wt.shape
    assert K == K2, (x.shape, wt.shape)

    tm = M if M <= _MAX_BATCH_TILE else _MAX_BATCH_TILE
    tn = N if N <= _LANE_TILE_CAP else _LANE_TILE_CAP
    assert M % tm == 0 and N % tn == 0 and K % 128 == 0, (M, N, K, tm, tn)

    grid = (M // tm, N // tn)
    x_spec = pl.BlockSpec((tm, K), lambda i, j: (i, 0))   # revisited across j -> no re-DMA
    w_spec = pl.BlockSpec((K, tn), lambda i, j: (0, j))   # contiguous full-K weight columns
    out_spec = pl.BlockSpec((tm, tn), lambda i, j: (i, j))

    if bits is None:
        kernel = _linear_relu_kernel
        in_specs = [x_spec, w_spec]
        operands = (x, wt)
    else:
        assert 0.0 <= p < 1.0
        assert bits.shape == (M, N) and bits.dtype == jnp.int32
        kernel = functools.partial(
            _linear_dropout_kernel,
            keep_threshold=_keep_threshold(p),
            scale=1.0 / (1.0 - p),
        )
        in_specs = [x_spec, w_spec, pl.BlockSpec((tm, tn), lambda i, j: (i, j))]
        operands = (x, wt, bits)

    return pl.pallas_call(
        kernel,
        out_shape=jax.ShapeDtypeStruct((M, N), out_dtype),
        grid_spec=pltpu.PrefetchScalarGridSpec(
            num_scalar_prefetch=0,
            grid=grid,
            in_specs=in_specs,
            out_specs=out_spec,
        ),
        compiler_params=pltpu.CompilerParams(
            dimension_semantics=("parallel", "parallel"),
            vmem_limit_bytes=_VMEM_LIMIT_BYTES,
        ),
    )(*operands)


# --------------------------- model glue ------------------------------------ #
def prepare_params(params, model_dim, weight_dtype=jnp.bfloat16):
    """One-time offline parameter prep (hoisted out of the forward path).

    Each (out, in) PyTorch weight is transposed to (in, out), zero-padded to
    (d_pad, d_pad) so every grid tile is full, and cast to bf16 (f32 accumulation
    preserved in-kernel via preferred_element_type).
    """
    d_pad = _pad_feature_dim(model_dim)
    prepped = []
    for w in params:
        n, k = w.shape
        wt = jnp.zeros((d_pad, d_pad), weight_dtype)
        wt = wt.at[:k, :n].set(w.T.astype(weight_dtype))
        prepped.append(wt)
    return tuple(prepped), d_pad


def functional_model_forward(x, padded_params_t, dropout_bits, model_dim, p=DROPOUT_P):
    """Mirrors FunctionalModel.forward:
       5x relu(linear(x, w_i)) followed by dropout(linear(x, w1), p=0.5, training)."""
    w1t, w2t, w3t, w4t, w5t = padded_params_t
    d_pad = w1t.shape[0]
    m, k = x.shape
    m_pad = _padded_batch(m)

    # Single bf16 cast + zero pad of the activations (no per-grid-step cast in-kernel).
    xp = jnp.zeros((m_pad, d_pad), jnp.bfloat16).at[:m, :k].set(x.astype(jnp.bfloat16))

    h = _fused_linear(xp, w1t)
    h = _fused_linear(h, w2t)
    h = _fused_linear(h, w3t)
    h = _fused_linear(h, w4t)
    h = _fused_linear(h, w5t)

    # Final layer reuses w1, then training-mode dropout (F.dropout default p=0.5).
    # Mask + 1/(1-p) scaling are fused into the matmul epilogue; output in f32.
    h = _fused_linear(h, w1t, bits=dropout_bits, p=p, out_dtype=jnp.float32)
    return h[:m, :model_dim]


def _reference_forward(x, padded_params_t, dropout_bits, model_dim, p=DROPOUT_P):
    """Pure-JAX reference mirroring the bf16 / f32-accum pipeline and the same mask."""
    w1t, w2t, w3t, w4t, w5t = padded_params_t
    d_pad = w1t.shape[0]
    m, k = x.shape
    m_pad = _padded_batch(m)
    h = jnp.zeros((m_pad, d_pad), jnp.bfloat16).at[:m, :k].set(x.astype(jnp.bfloat16))
    for wt in (w1t, w2t, w3t, w4t, w5t):
        acc = jnp.dot(h, wt, preferred_element_type=jnp.float32)
        h = jnp.maximum(acc, 0.0).astype(jnp.bfloat16)
    acc = jnp.dot(h, w1t, preferred_element_type=jnp.float32)
    keep = dropout_bits >= jnp.int32(_keep_threshold(p))
    out = jnp.where(keep, acc * jnp.float32(1.0 / (1.0 - p)), 0.0).astype(jnp.float32)
    return out[:m, :model_dim]


# ------------------------------- main -------------------------------------- #
if __name__ == "__main__":
    key = jax.random.PRNGKey(0)
    k_x, k_drop, k1, k2, k3, k4, k5 = jax.random.split(key, 7)

    # Deterministic synthetic parameters (torch.randn equivalents), shape (out, in).
    raw_params = tuple(
        jax.random.normal(kk, (MODEL_DIM, MODEL_DIM), dtype=jnp.float32)
        for kk in (k1, k2, k3, k4, k5)
    )
    x = jax.random.normal(k_x, (BATCH, MODEL_DIM), dtype=jnp.float32)

    # Offline prep: transpose + pad + bf16 cast (outside the forward path).
    padded_params_t, d_pad = prepare_params(raw_params, MODEL_DIM)

    # Dropout random bits (tiny at batch=8); shared with the reference so masks match.
    m_pad = _padded_batch(BATCH)
    dropout_bits = jax.lax.bitcast_convert_type(
        jax.random.bits(k_drop, (m_pad, d_pad), dtype=jnp.uint32), jnp.int32
    )

    fwd = jax.jit(functools.partial(functional_model_forward,
                                    model_dim=MODEL_DIM, p=DROPOUT_P))
    out = jax.block_until_ready(fwd(x, padded_params_t, dropout_bits))

    assert out.shape == (BATCH, MODEL_DIM)
    assert out.dtype == jnp.float32
    assert bool(jnp.all(jnp.isfinite(out)))

    # Tolerance check against the pure-JAX reference (same bf16 weights, same mask).
    ref = jax.block_until_ready(
        _reference_forward(x, padded_params_t, dropout_bits, MODEL_DIM, DROPOUT_P)
    )
    num = jnp.linalg.norm((out - ref).astype(jnp.float32))
    den = jnp.linalg.norm(ref.astype(jnp.float32)) + 1e-6
    assert float(num / den) < 2e-2, float(num / den)

    print("KERNEL_OK")
</pallas_src>

<mosaic_0001>
module attributes {stable_mosaic.version = 11 : i64} {
  func.func @_linear_relu_kernel(%arg0: i32, %arg1: i32, %arg2: memref<8x256xbf16, #tpu.memory_space<vmem>>, %arg3: memref<256x256xbf16, #tpu.memory_space<vmem>>, %arg4: memref<8x256xbf16, #tpu.memory_space<vmem>>) attributes {dimension_semantics = [#tpu.dimension_semantics<parallel>, #tpu.dimension_semantics<parallel>], iteration_bounds = array<i64: 1, 1>, scalar_prefetch = 0 : i64, scratch_operands = 0 : i64, tpu.core_type = #tpu.core_type<tc>, window_params = [{transform_indices = @transform_0, window_bounds = array<i64: 8, 256>}, {transform_indices = @transform_1, window_bounds = array<i64: 256, 256>}, {transform_indices = @transform_2, window_bounds = array<i64: 8, 256>}]} {
    %c0 = arith.constant 0 : index
    %c0_0 = arith.constant 0 : index
    %0 = vector.load %arg2[%c0, %c0_0] : memref<8x256xbf16, #tpu.memory_space<vmem>>, vector<8x256xbf16>
    %c0_1 = arith.constant 0 : index
    %c0_2 = arith.constant 0 : index
    %1 = vector.load %arg3[%c0_1, %c0_2] : memref<256x256xbf16, #tpu.memory_space<vmem>>, vector<256x256xbf16>
    %cst = arith.constant dense<0.000000e+00> : vector<8x256xf32>
    %2 = tpu.matmul %0, %1, %cst {dimension_numbers = #tpu.dot_dimension_numbers<[1], [0], [0], [1], [0, 0, 1, 1], [], []>} : vector<8x256xbf16>, vector<256x256xbf16>, vector<8x256xf32> -> vector<8x256xf32>
    %cst_3 = arith.constant 0.000000e+00 : f32
    %3 = vector.broadcast %cst_3 : f32 to vector<8x256xf32>
    %4 = arith.maximumf %2, %3 : vector<8x256xf32>
    %5 = arith.truncf %4 : vector<8x256xf32> to vector<8x256xbf16>
    %c0_4 = arith.constant 0 : index
    %c0_5 = arith.constant 0 : index
    %6 = vector.load %arg4[%c0_4, %c0_5] : memref<8x256xbf16, #tpu.memory_space<vmem>>, vector<8x256xbf16>
    tpu.vector_store %arg4[%c0_4, %c0_5], %5 {strides = array<i32>} : memref<8x256xbf16, #tpu.memory_space<vmem>>, vector<8x256xbf16>,
    return
  }
  func.func @transform_0(%arg0: i32, %arg1: i32) -> (i32, i32) {
    %c0_i32 = arith.constant 0 : i32
    %c0_i32_0 = arith.constant 0 : i32
    return %arg0, %c0_i32 : i32, i32
  }
  func.func @transform_1(%arg0: i32, %arg1: i32) -> (i32, i32) {
    %c0_i32 = arith.constant 0 : i32
    %c0_i32_0 = arith.constant 0 : i32
    return %c0_i32, %arg1 : i32, i32
  }
  func.func @transform_2(%arg0: i32, %arg1: i32) -> (i32, i32) {
    %c0_i32 = arith.constant 0 : i32
    return %arg0, %arg1 : i32, i32
  }
}

module attributes {stable_mosaic.version = 11 : i64} {
  func.func @_linear_dropout_kernel(%arg0: i32, %arg1: i32, %arg2: memref<8x256xbf16, #tpu.memory_space<vmem>>, %arg3: memref<256x256xbf16, #tpu.memory_space<vmem>>, %arg4: memref<8x256xi32, #tpu.memory_space<vmem>>, %arg5: memref<8x256xf32, #tpu.memory_space<vmem>>) attributes {dimension_semantics = [#tpu.dimension_semantics<parallel>, #tpu.dimension_semantics<parallel>], iteration_bounds = array<i64: 1, 1>, scalar_prefetch = 0 : i64, scratch_operands = 0 : i64, tpu.core_type = #tpu.core_type<tc>, window_params = [{transform_indices = @transform_0, window_bounds = array<i64: 8, 256>}, {transform_indices = @transform_1, window_bounds = array<i64: 256, 256>}, {transform_indices = @transform_2, window_bounds = array<i64: 8, 256>}, {transform_indices = @transform_3, window_bounds = array<i64: 8, 256>}]} {
    %c0 = arith.constant 0 : index
    %c0_0 = arith.constant 0 : index
    %0 = vector.load %arg2[%c0, %c0_0] : memref<8x256xbf16, #tpu.memory_space<vmem>>, vector<8x256xbf16>
    %c0_1 = arith.constant 0 : index
    %c0_2 = arith.constant 0 : index
    %1 = vector.load %arg3[%c0_1, %c0_2] : memref<256x256xbf16, #tpu.memory_space<vmem>>, vector<256x256xbf16>
    %cst = arith.constant dense<0.000000e+00> : vector<8x256xf32>
    %2 = tpu.matmul %0, %1, %cst {dimension_numbers = #tpu.dot_dimension_numbers<[1], [0], [0], [1], [0, 0, 1, 1], [], []>} : vector<8x256xbf16>, vector<256x256xbf16>, vector<8x256xf32> -> vector<8x256xf32>
    %c0_3 = arith.constant 0 : index
    %c0_4 = arith.constant 0 : index
    %3 = vector.load %arg4[%c0_3, %c0_4] : memref<8x256xi32, #tpu.memory_space<vmem>>, vector<8x256xi32>
    %c0_i32 = arith.constant 0 : i32
    %4 = vector.broadcast %c0_i32 : i32 to vector<8x256xi32>
    %5 = arith.cmpi sge, %3, %4 : vector<8x256xi32>
    %cst_5 = arith.constant 2.000000e+00 : f32
    %6 = vector.broadcast %cst_5 : f32 to vector<8x256xf32>
    %7 = arith.mulf %2, %6 : vector<8x256xf32>
    %cst_6 = arith.constant 0.000000e+00 : f32
    %8 = vector.broadcast %cst_6 : f32 to vector<8x256xf32>
    %9 = arith.select %5, %7, %8 : vector<8x256xi1>, vector<8x256xf32>
    %c0_7 = arith.constant 0 : index
    %c0_8 = arith.constant 0 : index
    %10 = vector.load %arg5[%c0_7, %c0_8] : memref<8x256xf32, #tpu.memory_space<vmem>>, vector<8x256xf32>
    tpu.vector_store %arg5[%c0_7, %c0_8], %9 {strides = array<i32>} : memref<8x256xf32, #tpu.memory_space<vmem>>, vector<8x256xf32>,
    return
  }
  func.func @transform_0(%arg0: i32, %arg1: i32) -> (i32, i32) {
    %c0_i32 = arith.constant 0 : i32
    %c0_i32_0 = arith.constant 0 : i32
    return %arg0, %c0_i32 : i32, i32
  }
  func.func @transform_1(%arg0: i32, %arg1: i32) -> (i32, i32) {
    %c0_i32 = arith.constant 0 : i32
    %c0_i32_0 = arith.constant 0 : i32
    return %c0_i32, %arg1 : i32, i32
  }
  func.func @transform_2(%arg0: i32, %arg1: i32) -> (i32, i32) {
    %c0_i32 = arith.constant 0 : i32
    return %arg0, %arg1 : i32, i32
  }
  func.func @transform_3(%arg0: i32, %arg1: i32) -> (i32, i32) {
    %c0_i32 = arith.constant 0 : i32
    return %arg0, %arg1 : i32, i32
  }
}

module attributes {stable_mosaic.version = 11 : i64} {
  func.func @_linear_relu_kernel(%arg0: i32, %arg1: i32, %arg2: memref<8x256xbf16, #tpu.memory_space<vmem>>, %arg3: memref<256x256xbf16, #tpu.memory_space<vmem>>, %arg4: memref<8x256xbf16, #tpu.memory_space<vmem>>) attributes {dimension_semantics = [#tpu.dimension_semantics<parallel>, #tpu.dimension_semantics<parallel>], iteration_bounds = array<i64: 1, 1>, scalar_prefetch = 0 : i64, scratch_operands = 0 : i64, tpu.core_type = #tpu.core_type<tc>, window_params = [{transform_indices = @transform_0, window_bounds = array<i64: 8, 256>}, {transform_indices = @transform_1, window_bounds = array<i64: 256, 256>}, {transform_indices = @transform_2, window_bounds = array<i64: 8, 256>}]} {
    %c0 = arith.constant 0 : index
    %c0_0 = arith.constant 0 : index
    %0 = vector.load %arg2[%c0, %c0_0] : memref<8x256xbf16, #tpu.memory_space<vmem>>, vector<8x256xbf16>
    %c0_1 = arith.constant 0 : index
    %c0_2 = arith.constant 0 : index
    %1 = vector.load %arg3[%c0_1, %c0_2] : memref<256x256xbf16, #tpu.memory_space<vmem>>, vector<256x256xbf16>
    %cst = arith.constant dense<0.000000e+00> : vector<8x256xf32>
    %2 = tpu.matmul %0, %1, %cst {dimension_numbers = #tpu.dot_dimension_numbers<[1], [0], [0], [1], [0, 0, 1, 1], [], []>} : vector<8x256xbf16>, vector<256x256xbf16>, vector<8x256xf32> -> vector<8x256xf32>
    %cst_3 = arith.constant 0.000000e+00 : f32
    %3 = vector.broadcast %cst_3 : f32 to vector<8x256xf32>
    %4 = arith.maximumf %2, %3 : vector<8x256xf32>
    %5 = arith.truncf %4 : vector<8x256xf32> to vector<8x256xbf16>
    %c0_4 = arith.constant 0 : index
    %c0_5 = arith.constant 0 : index
    %6 = vector.load %arg4[%c0_4, %c0_5] : memref<8x256xbf16, #tpu.memory_space<vmem>>, vector<8x256xbf16>
    tpu.vector_store %arg4[%c0_4, %c0_5], %5 {strides = array<i32>} : memref<8x256xbf16, #tpu.memory_space<vmem>>, vector<8x256xbf16>,
    return
  }
  func.func @transform_0(%arg0: i32, %arg1: i32) -> (i32, i32) {
    %c0_i32 = arith.constant 0 : i32
    %c0_i32_0 = arith.constant 0 : i32
    return %arg0, %c0_i32 : i32, i32
  }
  func.func @transform_1(%arg0: i32, %arg1: i32) -> (i32, i32) {
    %c0_i32 = arith.constant 0 : i32
    %c0_i32_0 = arith.constant 0 : i32
    return %c0_i32, %arg1 : i32, i32
  }
  func.func @transform_2(%arg0: i32, %arg1: i32) -> (i32, i32) {
    %c0_i32 = arith.constant 0 : i32
    return %arg0, %arg1 : i32, i32
  }
}

</mosaic_0001>

<llo_original>
// kernel: functional_model_forward.7
$region0: #{functional_model_forward.7}
  #allocation0 [shape = 'u32[]', space=smem, size = 0x4, offset = 0x4, fixed_abs, tag = 'smem constant byte address 0x4 - core index']
  #allocation1 [shape = 'u32[144,128]{1,0:T(1,128)}', space=vmem, size = 0x12000, scoped, tag = 'internal scratch']
  %s0 = inlined_call_operand.vmem [shape: bf16[8,256], index: 0, kind: input, shape index: {}]
  %s1 = inlined_call_operand.vmem [shape: bf16[256,256], index: 1, kind: input, shape index: {}]
  %s2 = inlined_call_operand.vmem [shape: bf16[8,256], index: 2, kind: output, shape index: {}]
  %s3 = sld [smem:[#allocation0]]
  $region18: #{functional_model_forward.7} parent=0
    _
  %s5 = ssub.s32 1, %s3
  %s6 = scalar_select 0, %s5, %s3
  // Predicated region
  $region2: #{functional_model_forward.7} parent=0 // pred_check
    _
  $region3: #{functional_model_forward.7} parent=0 // pred_check_branch
    %8 = sbr.rel (0) target = $region5
  $region4: #{functional_model_forward.7} parent=0 // pred_region
    _
  $region5: #{functional_model_forward.7} parent=0 // pred_fallthru
    _
  // Predicated region
  $region6: #{functional_model_forward.7} parent=0 // pred_check
    _
  $region7: #{functional_model_forward.7} parent=0 // pred_check_branch
    %10 = sbr.rel (0) target = $region9
  $region8: #{functional_model_forward.7} parent=0 // pred_region
    _
  $region9: #{functional_model_forward.7} parent=0 // pred_fallthru
    _
  %v11 = vld [vmem:[%s0] sm:$0xff]
  %v12 = vld [vmem:[%s1] sm:$0xff]
  %v13 = vld [vmem:[%s1 + $0x8] sm:$0xff]
  %v14 = vld [vmem:[%s1 + $0x10] sm:$0xff]
  %v15 = vld [vmem:[%s1 + $0x18] sm:$0xff]
  %v16 = vld [vmem:[%s1 + $0x20] sm:$0xff]
  %v17 = vld [vmem:[%s1 + $0x28] sm:$0xff]
  %v18 = vld [vmem:[%s1 + $0x30] sm:$0xff]
  %v19 = vld [vmem:[%s1 + $0x38] sm:$0xff]
  %v20 = vld [vmem:[%s1 + $0x40] sm:$0xff]
  %v21 = vld [vmem:[%s1 + $0x48] sm:$0xff]
  %v22 = vld [vmem:[%s1 + $0x50] sm:$0xff]
  %v23 = vld [vmem:[%s1 + $0x58] sm:$0xff]
  %v24 = vld [vmem:[%s1 + $0x60] sm:$0xff]
  %v25 = vld [vmem:[%s1 + $0x68] sm:$0xff]
  %v26 = vld [vmem:[%s1 + $0x70] sm:$0xff]
  %v27 = vld [vmem:[%s1 + $0x78] sm:$0xff]
  %v28 = vld [vmem:[%s1 + $0x80] sm:$0xff]
  %v29 = vld [vmem:[%s1 + $0x88] sm:$0xff]
  %v30 = vld [vmem:[%s1 + $0x90] sm:$0xff]
  %v31 = vld [vmem:[%s1 + $0x98] sm:$0xff]
  %v32 = vld [vmem:[%s1 + $0xa0] sm:$0xff]
  %v33 = vld [vmem:[%s1 + $0xa8] sm:$0xff]
  %v34 = vld [vmem:[%s1 + $0xb0] sm:$0xff]
  %v35 = vld [vmem:[%s1 + $0xb8] sm:$0xff]
  %v36 = vld [vmem:[%s1 + $0xc0] sm:$0xff]
  %v37 = vld [vmem:[%s1 + $0xc8] sm:$0xff]
  %v38 = vld [vmem:[%s1 + $0xd0] sm:$0xff]
  %v39 = vld [vmem:[%s1 + $0xd8] sm:$0xff]
  %v40 = vld [vmem:[%s1 + $0xe0] sm:$0xff]
  %v41 = vld [vmem:[%s1 + $0xe8] sm:$0xff]
  %v42 = vld [vmem:[%s1 + $0xf0] sm:$0xff]
  %v43 = vld [vmem:[%s1 + $0xf8] sm:$0xff]
  %v45 = vunpack.c.l.b16 %v11
  %v46 = vunpack.c.h.b16 %v11
  %v47 = vpack.c.b16 %v45, %v45
  %v48 = vpack.c.b16 %v46, %v46
  %v83 = vunpack.c.l.b16 %v12
  %v84 = vunpack.c.h.b16 %v12
  %v85 = vunpack.c.l.b16 %v13
  %v86 = vunpack.c.h.b16 %v13
  %v87 = vunpack.c.l.b16 %v14
  %v88 = vunpack.c.h.b16 %v14
  %v89 = vunpack.c.l.b16 %v15
  %v90 = vunpack.c.h.b16 %v15
  %v91 = vunpack.c.l.b16 %v16
  %v92 = vunpack.c.h.b16 %v16
  %v93 = vunpack.c.l.b16 %v17
  %v94 = vunpack.c.h.b16 %v17
  %v95 = vunpack.c.l.b16 %v18
  %v96 = vunpack.c.h.b16 %v18
  %v97 = vunpack.c.l.b16 %v19
  %v98 = vunpack.c.h.b16 %v19
  %v99 = vunpack.c.l.b16 %v20
  %v100 = vunpack.c.h.b16 %v20
  %v101 = vunpack.c.l.b16 %v21
  %v102 = vunpack.c.h.b16 %v21
  %v103 = vunpack.c.l.b16 %v22
  %v104 = vunpack.c.h.b16 %v22
  %v105 = vunpack.c.l.b16 %v23
  %v106 = vunpack.c.h.b16 %v23
  %v107 = vunpack.c.l.b16 %v24
  %v108 = vunpack.c.h.b16 %v24
  %v109 = vunpack.c.l.b16 %v25
  %v110 = vunpack.c.h.b16 %v25
  %v111 = vunpack.c.l.b16 %v26
  %v112 = vunpack.c.h.b16 %v26
  %v113 = vunpack.c.l.b16 %v27
  %v114 = vunpack.c.h.b16 %v27
  %v115 = vunpack.c.l.b16 %v28
  %v116 = vunpack.c.h.b16 %v28
  %v117 = vunpack.c.l.b16 %v29
  %v118 = vunpack.c.h.b16 %v29
  %v119 = vunpack.c.l.b16 %v30
  %v120 = vunpack.c.h.b16 %v30
  %v121 = vunpack.c.l.b16 %v31
  %v122 = vunpack.c.h.b16 %v31
  %v123 = vunpack.c.l.b16 %v32
  %v124 = vunpack.c.h.b16 %v32
  %v125 = vunpack.c.l.b16 %v33
  %v126 = vunpack.c.h.b16 %v33
  %v127 = vunpack.c.l.b16 %v34
  %v128 = vunpack.c.h.b16 %v34
  %v129 = vunpack.c.l.b16 %v35
  %v130 = vunpack.c.h.b16 %v35
  %v131 = vunpack.c.l.b16 %v36
  %v132 = vunpack.c.h.b16 %v36
  %v133 = vunpack.c.l.b16 %v37
  %v134 = vunpack.c.h.b16 %v37
  %v135 = vunpack.c.l.b16 %v38
  %v136 = vunpack.c.h.b16 %v38
  %v137 = vunpack.c.l.b16 %v39
  %v138 = vunpack.c.h.b16 %v39
  %v139 = vunpack.c.l.b16 %v40
  %v140 = vunpack.c.h.b16 %v40
  %v141 = vunpack.c.l.b16 %v41
  %v142 = vunpack.c.h.b16 %v41
  %v143 = vunpack.c.l.b16 %v42
  %v144 = vunpack.c.h.b16 %v42
  %v145 = vunpack.c.l.b16 %v43
  %v146 = vunpack.c.h.b16 %v43
  %v147 = vpack.c.b16 %v85, %v83
  %v148 = vpack.c.b16 %v86, %v84
  %v149 = vpack.c.b16 %v89, %v87
  %v150 = vpack.c.b16 %v90, %v88
  %v151 = vpack.c.b16 %v93, %v91
  %v152 = vpack.c.b16 %v94, %v92
  %v153 = vpack.c.b16 %v97, %v95
  %v154 = vpack.c.b16 %v98, %v96
  %v155 = vpack.c.b16 %v101, %v99
  %v156 = vpack.c.b16 %v102, %v100
  %v157 = vpack.c.b16 %v105, %v103
  %v158 = vpack.c.b16 %v106, %v104
  %v159 = vpack.c.b16 %v109, %v107
  %v160 = vpack.c.b16 %v110, %v108
  %v161 = vpack.c.b16 %v113, %v111
  %v162 = vpack.c.b16 %v114, %v112
  %v163 = vpack.c.b16 %v117, %v115
  %v164 = vpack.c.b16 %v118, %v116
  %v165 = vpack.c.b16 %v121, %v119
  %v166 = vpack.c.b16 %v122, %v120
  %v167 = vpack.c.b16 %v125, %v123
  %v168 = vpack.c.b16 %v126, %v124
  %v169 = vpack.c.b16 %v129, %v127
  %v170 = vpack.c.b16 %v130, %v128
  %v171 = vpack.c.b16 %v133, %v131
  %v172 = vpack.c.b16 %v134, %v132
  %v173 = vpack.c.b16 %v137, %v135
  %v174 = vpack.c.b16 %v138, %v136
  %v175 = vpack.c.b16 %v141, %v139
  %v176 = vpack.c.b16 %v142, %v140
  %v177 = vpack.c.b16 %v145, %v143
  %v178 = vpack.c.b16 %v146, %v144
  %211 = vmatprep.subr.bf16.mxu0 %v148
  %212 = vmatpush1.bf16.msra.mxu0 %v147
  %213 = vmatprep.subr.bf16.mxu0 %v150
  %214 = vmatpush1.bf16.msra.mxu0 %v149
  %215 = vmatprep.subr.bf16.mxu0 %v152
  %216 = vmatpush1.bf16.msra.mxu0 %v151
  %217 = vmatprep.subr.bf16.mxu0 %v154
  %218 = vmatpush1.bf16.msra.mxu0 %v153
  %219 = vmatprep.subr.bf16.mxu0 %v156
  %220 = vmatpush1.bf16.msra.mxu0 %v155
  %221 = vmatprep.subr.bf16.mxu0 %v158
  %222 = vmatpush1.bf16.msra.mxu0 %v157
  %223 = vmatprep.subr.bf16.mxu0 %v160
  %224 = vmatpush1.bf16.msra.mxu0 %v159
  %225 = vmatprep.subr.bf16.mxu0 %v162
  %226 = vmatpush1.bf16.msra.mxu0 %v161
  %227 = vmatprep.subr.bf16.mxu0 %v164
  %228 = vmatpush1.bf16.msra.mxu0 %v163
  %229 = vmatprep.subr.bf16.mxu0 %v166
  %230 = vmatpush1.bf16.msra.mxu0 %v165
  %231 = vmatprep.subr.bf16.mxu0 %v168
  %232 = vmatpush1.bf16.msra.mxu0 %v167
  %233 = vmatprep.subr.bf16.mxu0 %v170
  %234 = vmatpush1.bf16.msra.mxu0 %v169
  %235 = vmatprep.subr.bf16.mxu0 %v172
  %236 = vmatpush1.bf16.msra.mxu0 %v171
  %237 = vmatprep.subr.bf16.mxu0 %v174
  %238 = vmatpush1.bf16.msra.mxu0 %v173
  %239 = vmatprep.subr.bf16.mxu0 %v176
  %240 = vmatpush1.bf16.msra.mxu0 %v175
  %241 = vmatprep.subr.bf16.mxu0 %v178
  %242 = vmatpush1.bf16.msra.mxu0 %v177
  %243 = vmatprep.mubr.bf16.mxu0 %v48
  %244 = vmatmul.mubr.bf16.gmra.mrb[0].mxu0 %v47
  %v245 = vpop.f32.mrb[0].mxu0
  %v246 = vadd.f32 0.0, %v245
  %v247 = vpop.f32.mrb[0].mxu0
  %v248 = vadd.f32 0.0, %v247
  %v249 = vpop.f32.mrb[0].mxu0
  %v250 = vpop.f32.mrb[0].mxu0
  %251 = vdwg.mxu0
  %v252 = vmax.f32 %v246, 0.0
  %v253 = vmax.f32 %v248, 0.0
  %v254 = vpack.c.bf16 %v252, %v252
  %v255 = vpack.c.bf16 %v253, %v253
  %v258 = vunpack.c.l.b16 %v254
  %v259 = vunpack.c.l.b16 %v255
  %v260 = vpack.c.b16 %v259, %v258
  %262 = vst [vmem:[%s2] sm:$0xff] %v260
  // Predicated region
  $region10: #{functional_model_forward.7} parent=0 // pred_check
    _
  $region11: #{functional_model_forward.7} parent=0 // pred_check_branch
    %264 = sbr.rel (0) target = $region13
  $region12: #{functional_model_forward.7} parent=0 // pred_region
    _
  $region13: #{functional_model_forward.7} parent=0 // pred_fallthru
    _
  // Predicated region
  $region14: #{functional_model_forward.7} parent=0 // pred_check
    _
  $region15: #{functional_model_forward.7} parent=0 // pred_check_branch
    %266 = sbr.rel (0) target = $region17
  $region16: #{functional_model_forward.7} parent=0 // pred_region
    _
  $region17: #{functional_model_forward.7} parent=0 // pred_fallthru
    _

// kernel: functional_model_forward.6
$region0: #{functional_model_forward.6}
  #allocation0 [shape = 'u32[]', space=smem, size = 0x4, offset = 0x4, fixed_abs, tag = 'smem constant byte address 0x4 - core index']
  #allocation1 [shape = 'u32[144,128]{1,0:T(1,128)}', space=vmem, size = 0x12000, scoped, tag = 'internal scratch']
  %s0 = inlined_call_operand.vmem [shape: bf16[8,256], index: 0, kind: input, shape index: {}]
  %s1 = inlined_call_operand.hbm [shape: bf16[256,256], index: 1, kind: input, shape index: {}]
  %s2 = inlined_call_operand.vmem [shape: bf16[8,256], index: 2, kind: output, shape index: {}]
  %s3 = sld [smem:[#allocation0]]
  $region22: #{functional_model_forward.6} parent=0
    _
  %s5 = ssub.s32 1, %s3
  %s6 = scalar_select 0, %s5, %s3
  $region1: #{functional_model_forward.6} parent=0
    #allocation2 [shape = 'u8[131072]{0}', space=vmem, size = 0x20000, scoped, tag = 'input window, operand 1, single buffered']
    #allocation3 [shape = 's32[1]{0}', space=sflag, size = 0x4, scoped, tag = 'scoped memory for functional_model_forward.6']
    %7 = vsyncpa [#allocation3], 0
    // Predicated region
    $region2: #{functional_model_forward.6} parent=1 // pred_check
      _
    $region3: #{functional_model_forward.6} parent=1 // pred_check_branch
      %9 = sbr.rel (0) target = $region5
    $region4: #{functional_model_forward.6} parent=1 // pred_region
      _
    $region5: #{functional_model_forward.6} parent=1 // pred_fallthru
      _
    // Predicated region
    $region6: #{functional_model_forward.6} parent=1 // pred_check
      _
    $region7: #{functional_model_forward.6} parent=1 // pred_check_branch
      %11 = sbr.rel (0) target = $region9
    $region8: #{functional_model_forward.6} parent=1 // pred_region
      %s13 = ssub.s32 4096, 4096
      %14 = vsyncadd [#allocation3], %s13
      %s15 = sshll.u32 [#allocation2], 4
      %s16 = int_to_ptr.vmem [resolvable:$true] %s15
      %21 = dma.hbm_to_vmem [thread:$0]  %s1, 4096, %s16, [#allocation3], 128, 128, 8
    $region9: #{functional_model_forward.6} parent=1 // pred_fallthru
      _
    // Predicated region
    $region10: #{functional_model_forward.6} parent=1 // pred_check
      _
    $region11: #{functional_model_forward.6} parent=1 // pred_check_branch
      %23 = sbr.rel (0) target = $region13
    $region12: #{functional_model_forward.6} parent=1 // pred_region
      %24 = dma.done [#allocation3], 4096
    $region13: #{functional_model_forward.6} parent=1 // pred_fallthru
      _
    %v25 = vld [vmem:[%s0] sm:$0xff]
    %v26 = vld [vmem:[#allocation2] sm:$0xff]
    %v27 = vld [vmem:[#allocation2 + $0x8] sm:$0xff]
    %v28 = vld [vmem:[#allocation2 + $0x10] sm:$0xff]
    %v29 = vld [vmem:[#allocation2 + $0x18] sm:$0xff]
    %v30 = vld [vmem:[#allocation2 + $0x20] sm:$0xff]
    %v31 = vld [vmem:[#allocation2 + $0x28] sm:$0xff]
    %v32 = vld [vmem:[#allocation2 + $0x30] sm:$0xff]
    %v33 = vld [vmem:[#allocation2 + $0x38] sm:$0xff]
    %v34 = vld [vmem:[#allocation2 + $0x40] sm:$0xff]
    %v35 = vld [vmem:[#allocation2 + $0x48] sm:$0xff]
    %v36 = vld [vmem:[#allocation2 + $0x50] sm:$0xff]
    %v37 = vld [vmem:[#allocation2 + $0x58] sm:$0xff]
    %v38 = vld [vmem:[#allocation2 + $0x60] sm:$0xff]
    %v39 = vld [vmem:[#allocation2 + $0x68] sm:$0xff]
    %v40 = vld [vmem:[#allocation2 + $0x70] sm:$0xff]
    %v41 = vld [vmem:[#allocation2 + $0x78] sm:$0xff]
    %v42 = vld [vmem:[#allocation2 + $0x80] sm:$0xff]
    %v43 = vld [vmem:[#allocation2 + $0x88] sm:$0xff]
    %v44 = vld [vmem:[#allocation2 + $0x90] sm:$0xff]
    %v45 = vld [vmem:[#allocation2 + $0x98] sm:$0xff]
    %v46 = vld [vmem:[#allocation2 + $0xa0] sm:$0xff]
    %v47 = vld [vmem:[#allocation2 + $0xa8] sm:$0xff]
    %v48 = vld [vmem:[#allocation2 + $0xb0] sm:$0xff]
    %v49 = vld [vmem:[#allocation2 + $0xb8] sm:$0xff]
    %v50 = vld [vmem:[#allocation2 + $0xc0] sm:$0xff]
    %v51 = vld [vmem:[#allocation2 + $0xc8] sm:$0xff]
    %v52 = vld [vmem:[#allocation2 + $0xd0] sm:$0xff]
    %v53 = vld [vmem:[#allocation2 + $0xd8] sm:$0xff]
    %v54 = vld [vmem:[#allocation2 + $0xe0] sm:$0xff]
    %v55 = vld [vmem:[#allocation2 + $0xe8] sm:$0xff]
    %v56 = vld [vmem:[#allocation2 + $0xf0] sm:$0xff]
    %v57 = vld [vmem:[#allocation2 + $0xf8] sm:$0xff]
    %v59 = vunpack.c.l.b16 %v25
    %v60 = vunpack.c.h.b16 %v25
    %v61 = vpack.c.b16 %v59, %v59
    %v62 = vpack.c.b16 %v60, %v60
    %v97 = vunpack.c.l.b16 %v26
    %v98 = vunpack.c.h.b16 %v26
    %v99 = vunpack.c.l.b16 %v27
    %v100 = vunpack.c.h.b16 %v27
    %v101 = vunpack.c.l.b16 %v28
    %v102 = vunpack.c.h.b16 %v28
    %v103 = vunpack.c.l.b16 %v29
    %v104 = vunpack.c.h.b16 %v29
    %v105 = vunpack.c.l.b16 %v30
    %v106 = vunpack.c.h.b16 %v30
    %v107 = vunpack.c.l.b16 %v31
    %v108 = vunpack.c.h.b16 %v31
    %v109 = vunpack.c.l.b16 %v32
    %v110 = vunpack.c.h.b16 %v32
    %v111 = vunpack.c.l.b16 %v33
    %v112 = vunpack.c.h.b16 %v33
    %v113 = vunpack.c.l.b16 %v34
    %v114 = vunpack.c.h.b16 %v34
    %v115 = vunpack.c.l.b16 %v35
    %v116 = vunpack.c.h.b16 %v35
    %v117 = vunpack.c.l.b16 %v36
    %v118 = vunpack.c.h.b16 %v36
    %v119 = vunpack.c.l.b16 %v37
    %v120 = vunpack.c.h.b16 %v37
    %v121 = vunpack.c.l.b16 %v38
    %v122 = vunpack.c.h.b16 %v38
    %v123 = vunpack.c.l.b16 %v39
    %v124 = vunpack.c.h.b16 %v39
    %v125 = vunpack.c.l.b16 %v40
    %v126 = vunpack.c.h.b16 %v40
    %v127 = vunpack.c.l.b16 %v41
    %v128 = vunpack.c.h.b16 %v41
    %v129 = vunpack.c.l.b16 %v42
    %v130 = vunpack.c.h.b16 %v42
    %v131 = vunpack.c.l.b16 %v43
    %v132 = vunpack.c.h.b16 %v43
    %v133 = vunpack.c.l.b16 %v44
    %v134 = vunpack.c.h.b16 %v44
    %v135 = vunpack.c.l.b16 %v45
    %v136 = vunpack.c.h.b16 %v45
    %v137 = vunpack.c.l.b16 %v46
    %v138 = vunpack.c.h.b16 %v46
    %v139 = vunpack.c.l.b16 %v47
    %v140 = vunpack.c.h.b16 %v47
    %v141 = vunpack.c.l.b16 %v48
    %v142 = vunpack.c.h.b16 %v48
    %v143 = vunpack.c.l.b16 %v49
    %v144 = vunpack.c.h.b16 %v49
    %v145 = vunpack.c.l.b16 %v50
    %v146 = vunpack.c.h.b16 %v50
    %v147 = vunpack.c.l.b16 %v51
    %v148 = vunpack.c.h.b16 %v51
    %v149 = vunpack.c.l.b16 %v52
    %v150 = vunpack.c.h.b16 %v52
    %v151 = vunpack.c.l.b16 %v53
    %v152 = vunpack.c.h.b16 %v53
    %v153 = vunpack.c.l.b16 %v54
    %v154 = vunpack.c.h.b16 %v54
    %v155 = vunpack.c.l.b16 %v55
    %v156 = vunpack.c.h.b16 %v55
    %v157 = vunpack.c.l.b16 %v56
    %v158 = vunpack.c.h.b16 %v56
    %v159 = vunpack.c.l.b16 %v57
    %v160 = vunpack.c.h.b16 %v57
    %v161 = vpack.c.b16 %v99, %v97
    %v162 = vpack.c.b16 %v100, %v98
    %v163 = vpack.c.b16 %v103, %v101
    %v164 = vpack.c.b16 %v104, %v102
    %v165 = vpack.c.b16 %v107, %v105
    %v166 = vpack.c.b16 %v108, %v106
    %v167 = vpack.c.b16 %v111, %v109
    %v168 = vpack.c.b16 %v112, %v110
    %v169 = vpack.c.b16 %v115, %v113
    %v170 = vpack.c.b16 %v116, %v114
    %v171 = vpack.c.b16 %v119, %v117
    %v172 = vpack.c.b16 %v120, %v118
    %v173 = vpack.c.b16 %v123, %v121
    %v174 = vpack.c.b16 %v124, %v122
    %v175 = vpack.c.b16 %v127, %v125
    %v176 = vpack.c.b16 %v128, %v126
    %v177 = vpack.c.b16 %v131, %v129
    %v178 = vpack.c.b16 %v132, %v130
    %v179 = vpack.c.b16 %v135, %v133
    %v180 = vpack.c.b16 %v136, %v134
    %v181 = vpack.c.b16 %v139, %v137
    %v182 = vpack.c.b16 %v140, %v138
    %v183 = vpack.c.b16 %v143, %v141
    %v184 = vpack.c.b16 %v144, %v142
    %v185 = vpack.c.b16 %v147, %v145
    %v186 = vpack.c.b16 %v148, %v146
    %v187 = vpack.c.b16 %v151, %v149
    %v188 = vpack.c.b16 %v152, %v150
    %v189 = vpack.c.b16 %v155, %v153
    %v190 = vpack.c.b16 %v156, %v154
    %v191 = vpack.c.b16 %v159, %v157
    %v192 = vpack.c.b16 %v160, %v158
    %225 = vmatprep.subr.bf16.mxu0 %v162
    %226 = vmatpush1.bf16.msra.mxu0 %v161
    %227 = vmatprep.subr.bf16.mxu0 %v164
    %228 = vmatpush1.bf16.msra.mxu0 %v163
    %229 = vmatprep.subr.bf16.mxu0 %v166
    %230 = vmatpush1.bf16.msra.mxu0 %v165
    %231 = vmatprep.subr.bf16.mxu0 %v168
    %232 = vmatpush1.bf16.msra.mxu0 %v167
    %233 = vmatprep.subr.bf16.mxu0 %v170
    %234 = vmatpush1.bf16.msra.mxu0 %v169
    %235 = vmatprep.subr.bf16.mxu0 %v172
    %236 = vmatpush1.bf16.msra.mxu0 %v171
    %237 = vmatprep.subr.bf16.mxu0 %v174
    %238 = vmatpush1.bf16.msra.mxu0 %v173
    %239 = vmatprep.subr.bf16.mxu0 %v176
    %240 = vmatpush1.bf16.msra.mxu0 %v175
    %241 = vmatprep.subr.bf16.mxu0 %v178
    %242 = vmatpush1.bf16.msra.mxu0 %v177
    %243 = vmatprep.subr.bf16.mxu0 %v180
    %244 = vmatpush1.bf16.msra.mxu0 %v179
    %245 = vmatprep.subr.bf16.mxu0 %v182
    %246 = vmatpush1.bf16.msra.mxu0 %v181
    %247 = vmatprep.subr.bf16.mxu0 %v184
    %248 = vmatpush1.bf16.msra.mxu0 %v183
    %249 = vmatprep.subr.bf16.mxu0 %v186
    %250 = vmatpush1.bf16.msra.mxu0 %v185
    %251 = vmatprep.subr.bf16.mxu0 %v188
    %252 = vmatpush1.bf16.msra.mxu0 %v187
    %253 = vmatprep.subr.bf16.mxu0 %v190
    %254 = vmatpush1.bf16.msra.mxu0 %v189
    %255 = vmatprep.subr.bf16.mxu0 %v192
    %256 = vmatpush1.bf16.msra.mxu0 %v191
    %257 = vmatprep.mubr.bf16.mxu0 %v62
    %258 = vmatmul.mubr.bf16.gmra.mrb[0].mxu0 %v61
    %v259 = vpop.f32.mrb[0].mxu0
    %v260 = vadd.f32 0.0, %v259
    %v261 = vpop.f32.mrb[0].mxu0
    %v262 = vadd.f32 0.0, %v261
    %v263 = vpop.f32.mrb[0].mxu0
    %v264 = vpop.f32.mrb[0].mxu0
    %265 = vdwg.mxu0
    %v266 = vmax.f32 %v260, 0.0
    %v267 = vmax.f32 %v262, 0.0
    %v268 = vpack.c.bf16 %v266, %v266
    %v269 = vpack.c.bf16 %v267, %v267
    %v272 = vunpack.c.l.b16 %v268
    %v273 = vunpack.c.l.b16 %v269
    %v274 = vpack.c.b16 %v273, %v272
    %276 = vst [vmem:[%s2] sm:$0xff] %v274
    // Predicated region
    $region14: #{functional_model_forward.6} parent=1 // pred_check
      _
    $region15: #{functional_model_forward.6} parent=1 // pred_check_branch
      %278 = sbr.rel (0) target = $region17
    $region16: #{functional_model_forward.6} parent=1 // pred_region
      _
    $region17: #{functional_model_forward.6} parent=1 // pred_fallthru
      _
    // Predicated region
    $region18: #{functional_model_forward.6} parent=1 // pred_check
      _
    $region19: #{functional_model_forward.6} parent=1 // pred_check_branch
      %280 = sbr.rel (0) target = $region21
    $region20: #{functional_model_forward.6} parent=1 // pred_region
      _
    $region21: #{functional_model_forward.6} parent=1 // pred_fallthru
      _
    %281 = vsyncpa [#allocation3], 1

// kernel: functional_model_forward.11
$region0: #{functional_model_forward.11}
  #allocation0 [shape = 'u32[]', space=smem, size = 0x4, offset = 0x4, fixed_abs, tag = 'smem constant byte address 0x4 - core index']
  #allocation1 [shape = 'u32[144,128]{1,0:T(1,128)}', space=vmem, size = 0x12000, scoped, tag = 'internal scratch']
  %s0 = inlined_call_operand.vmem [shape: bf16[8,256], index: 0, kind: input, shape index: {}]
  %s1 = inlined_call_operand.vmem [shape: bf16[256,256], index: 1, kind: input, shape index: {}]
  %s2 = inlined_call_operand.vmem [shape: s32[8,256], index: 2, kind: input, shape index: {}]
  %s3 = inlined_call_operand.hbm [shape: f32[8,256], index: 3, kind: output, shape index: {}]
  %s4 = sld [smem:[#allocation0]]
  $region22: #{functional_model_forward.11} parent=0
    _
  %s6 = ssub.s32 1, %s4
  %s7 = scalar_select 0, %s6, %s4
  $region1: #{functional_model_forward.11} parent=0
    #allocation2 [shape = 'u8[8192]{0}', space=vmem, size = 0x2000, scoped, tag = 'output window, operand 0, single buffered']
    #allocation3 [shape = 's32[1]{0}', space=sflag, size = 0x4, scoped, tag = 'scoped memory for functional_model_forward.11']
    %8 = vsyncpa [#allocation3], 0
    // Predicated region
    $region2: #{functional_model_forward.11} parent=1 // pred_check
      _
    $region3: #{functional_model_forward.11} parent=1 // pred_check_branch
      %10 = sbr.rel (0) target = $region5
    $region4: #{functional_model_forward.11} parent=1 // pred_region
      _
    $region5: #{functional_model_forward.11} parent=1 // pred_fallthru
      _
    // Predicated region
    $region6: #{functional_model_forward.11} parent=1 // pred_check
      _
    $region7: #{functional_model_forward.11} parent=1 // pred_check_branch
      %12 = sbr.rel (0) target = $region9
    $region8: #{functional_model_forward.11} parent=1 // pred_region
      _
    $region9: #{functional_model_forward.11} parent=1 // pred_fallthru
      _
    // Predicated region
    $region10: #{functional_model_forward.11} parent=1 // pred_check
      _
    $region11: #{functional_model_forward.11} parent=1 // pred_check_branch
      %14 = sbr.rel (0) target = $region13
    $region12: #{functional_model_forward.11} parent=1 // pred_region
      _
    $region13: #{functional_model_forward.11} parent=1 // pred_fallthru
      _
    %v15 = vld [vmem:[%s0] sm:$0xff]
    %v16 = vld [vmem:[%s1] sm:$0xff]
    %v17 = vld [vmem:[%s1 + $0x8] sm:$0xff]
    %v18 = vld [vmem:[%s1 + $0x10] sm:$0xff]
    %v19 = vld [vmem:[%s1 + $0x18] sm:$0xff]
    %v20 = vld [vmem:[%s1 + $0x20] sm:$0xff]
    %v21 = vld [vmem:[%s1 + $0x28] sm:$0xff]
    %v22 = vld [vmem:[%s1 + $0x30] sm:$0xff]
    %v23 = vld [vmem:[%s1 + $0x38] sm:$0xff]
    %v24 = vld [vmem:[%s1 + $0x40] sm:$0xff]
    %v25 = vld [vmem:[%s1 + $0x48] sm:$0xff]
    %v26 = vld [vmem:[%s1 + $0x50] sm:$0xff]
    %v27 = vld [vmem:[%s1 + $0x58] sm:$0xff]
    %v28 = vld [vmem:[%s1 + $0x60] sm:$0xff]
    %v29 = vld [vmem:[%s1 + $0x68] sm:$0xff]
    %v30 = vld [vmem:[%s1 + $0x70] sm:$0xff]
    %v31 = vld [vmem:[%s1 + $0x78] sm:$0xff]
    %v32 = vld [vmem:[%s1 + $0x80] sm:$0xff]
    %v33 = vld [vmem:[%s1 + $0x88] sm:$0xff]
    %v34 = vld [vmem:[%s1 + $0x90] sm:$0xff]
    %v35 = vld [vmem:[%s1 + $0x98] sm:$0xff]
    %v36 = vld [vmem:[%s1 + $0xa0] sm:$0xff]
    %v37 = vld [vmem:[%s1 + $0xa8] sm:$0xff]
    %v38 = vld [vmem:[%s1 + $0xb0] sm:$0xff]
    %v39 = vld [vmem:[%s1 + $0xb8] sm:$0xff]
    %v40 = vld [vmem:[%s1 + $0xc0] sm:$0xff]
    %v41 = vld [vmem:[%s1 + $0xc8] sm:$0xff]
    %v42 = vld [vmem:[%s1 + $0xd0] sm:$0xff]
    %v43 = vld [vmem:[%s1 + $0xd8] sm:$0xff]
    %v44 = vld [vmem:[%s1 + $0xe0] sm:$0xff]
    %v45 = vld [vmem:[%s1 + $0xe8] sm:$0xff]
    %v46 = vld [vmem:[%s1 + $0xf0] sm:$0xff]
    %v47 = vld [vmem:[%s1 + $0xf8] sm:$0xff]
    %v49 = vunpack.c.l.b16 %v15
    %v50 = vunpack.c.h.b16 %v15
    %v51 = vpack.c.b16 %v49, %v49
    %v52 = vpack.c.b16 %v50, %v50
    %v87 = vunpack.c.l.b16 %v16
    %v88 = vunpack.c.h.b16 %v16
    %v89 = vunpack.c.l.b16 %v17
    %v90 = vunpack.c.h.b16 %v17
    %v91 = vunpack.c.l.b16 %v18
    %v92 = vunpack.c.h.b16 %v18
    %v93 = vunpack.c.l.b16 %v19
    %v94 = vunpack.c.h.b16 %v19
    %v95 = vunpack.c.l.b16 %v20
    %v96 = vunpack.c.h.b16 %v20
    %v97 = vunpack.c.l.b16 %v21
    %v98 = vunpack.c.h.b16 %v21
    %v99 = vunpack.c.l.b16 %v22
    %v100 = vunpack.c.h.b16 %v22
    %v101 = vunpack.c.l.b16 %v23
    %v102 = vunpack.c.h.b16 %v23
    %v103 = vunpack.c.l.b16 %v24
    %v104 = vunpack.c.h.b16 %v24
    %v105 = vunpack.c.l.b16 %v25
    %v106 = vunpack.c.h.b16 %v25
    %v107 = vunpack.c.l.b16 %v26
    %v108 = vunpack.c.h.b16 %v26
    %v109 = vunpack.c.l.b16 %v27
    %v110 = vunpack.c.h.b16 %v27
    %v111 = vunpack.c.l.b16 %v28
    %v112 = vunpack.c.h.b16 %v28
    %v113 = vunpack.c.l.b16 %v29
    %v114 = vunpack.c.h.b16 %v29
    %v115 = vunpack.c.l.b16 %v30
    %v116 = vunpack.c.h.b16 %v30
    %v117 = vunpack.c.l.b16 %v31
    %v118 = vunpack.c.h.b16 %v31
    %v119 = vunpack.c.l.b16 %v32
    %v120 = vunpack.c.h.b16 %v32
    %v121 = vunpack.c.l.b16 %v33
    %v122 = vunpack.c.h.b16 %v33
    %v123 = vunpack.c.l.b16 %v34
    %v124 = vunpack.c.h.b16 %v34
    %v125 = vunpack.c.l.b16 %v35
    %v126 = vunpack.c.h.b16 %v35
    %v127 = vunpack.c.l.b16 %v36
    %v128 = vunpack.c.h.b16 %v36
    %v129 = vunpack.c.l.b16 %v37
    %v130 = vunpack.c.h.b16 %v37
    %v131 = vunpack.c.l.b16 %v38
    %v132 = vunpack.c.h.b16 %v38
    %v133 = vunpack.c.l.b16 %v39
    %v134 = vunpack.c.h.b16 %v39
    %v135 = vunpack.c.l.b16 %v40
    %v136 = vunpack.c.h.b16 %v40
    %v137 = vunpack.c.l.b16 %v41
    %v138 = vunpack.c.h.b16 %v41
    %v139 = vunpack.c.l.b16 %v42
    %v140 = vunpack.c.h.b16 %v42
    %v141 = vunpack.c.l.b16 %v43
    %v142 = vunpack.c.h.b16 %v43
    %v143 = vunpack.c.l.b16 %v44
    %v144 = vunpack.c.h.b16 %v44
    %v145 = vunpack.c.l.b16 %v45
    %v146 = vunpack.c.h.b16 %v45
    %v147 = vunpack.c.l.b16 %v46
    %v148 = vunpack.c.h.b16 %v46
    %v149 = vunpack.c.l.b16 %v47
    %v150 = vunpack.c.h.b16 %v47
    %v151 = vpack.c.b16 %v89, %v87
    %v152 = vpack.c.b16 %v90, %v88
    %v153 = vpack.c.b16 %v93, %v91
    %v154 = vpack.c.b16 %v94, %v92
    %v155 = vpack.c.b16 %v97, %v95
    %v156 = vpack.c.b16 %v98, %v96
    %v157 = vpack.c.b16 %v101, %v99
    %v158 = vpack.c.b16 %v102, %v100
    %v159 = vpack.c.b16 %v105, %v103
    %v160 = vpack.c.b16 %v106, %v104
    %v161 = vpack.c.b16 %v109, %v107
    %v162 = vpack.c.b16 %v110, %v108
    %v163 = vpack.c.b16 %v113, %v111
    %v164 = vpack.c.b16 %v114, %v112
    %v165 = vpack.c.b16 %v117, %v115
    %v166 = vpack.c.b16 %v118, %v116
    %v167 = vpack.c.b16 %v121, %v119
    %v168 = vpack.c.b16 %v122, %v120
    %v169 = vpack.c.b16 %v125, %v123
    %v170 = vpack.c.b16 %v126, %v124
    %v171 = vpack.c.b16 %v129, %v127
    %v172 = vpack.c.b16 %v130, %v128
    %v173 = vpack.c.b16 %v133, %v131
    %v174 = vpack.c.b16 %v134, %v132
    %v175 = vpack.c.b16 %v137, %v135
    %v176 = vpack.c.b16 %v138, %v136
    %v177 = vpack.c.b16 %v141, %v139
    %v178 = vpack.c.b16 %v142, %v140
    %v179 = vpack.c.b16 %v145, %v143
    %v180 = vpack.c.b16 %v146, %v144
    %v181 = vpack.c.b16 %v149, %v147
    %v182 = vpack.c.b16 %v150, %v148
    %215 = vmatprep.subr.bf16.mxu0 %v152
    %216 = vmatpush1.bf16.msra.mxu0 %v151
    %217 = vmatprep.subr.bf16.mxu0 %v154
    %218 = vmatpush1.bf16.msra.mxu0 %v153
    %219 = vmatprep.subr.bf16.mxu0 %v156
    %220 = vmatpush1.bf16.msra.mxu0 %v155
    %221 = vmatprep.subr.bf16.mxu0 %v158
    %222 = vmatpush1.bf16.msra.mxu0 %v157
    %223 = vmatprep.subr.bf16.mxu0 %v160
    %224 = vmatpush1.bf16.msra.mxu0 %v159
    %225 = vmatprep.subr.bf16.mxu0 %v162
    %226 = vmatpush1.bf16.msra.mxu0 %v161
    %227 = vmatprep.subr.bf16.mxu0 %v164
    %228 = vmatpush1.bf16.msra.mxu0 %v163
    %229 = vmatprep.subr.bf16.mxu0 %v166
    %230 = vmatpush1.bf16.msra.mxu0 %v165
    %231 = vmatprep.subr.bf16.mxu0 %v168
    %232 = vmatpush1.bf16.msra.mxu0 %v167
    %233 = vmatprep.subr.bf16.mxu0 %v170
    %234 = vmatpush1.bf16.msra.mxu0 %v169
    %235 = vmatprep.subr.bf16.mxu0 %v172
    %236 = vmatpush1.bf16.msra.mxu0 %v171
    %237 = vmatprep.subr.bf16.mxu0 %v174
    %238 = vmatpush1.bf16.msra.mxu0 %v173
    %239 = vmatprep.subr.bf16.mxu0 %v176
    %240 = vmatpush1.bf16.msra.mxu0 %v175
    %241 = vmatprep.subr.bf16.mxu0 %v178
    %242 = vmatpush1.bf16.msra.mxu0 %v177
    %243 = vmatprep.subr.bf16.mxu0 %v180
    %244 = vmatpush1.bf16.msra.mxu0 %v179
    %245 = vmatprep.subr.bf16.mxu0 %v182
    %246 = vmatpush1.bf16.msra.mxu0 %v181
    %247 = vmatprep.mubr.bf16.mxu0 %v52
    %248 = vmatmul.mubr.bf16.gmra.mrb[0].mxu0 %v51
    %v249 = vpop.f32.mrb[0].mxu0
    %v250 = vadd.f32 0.0, %v249
    %v251 = vpop.f32.mrb[0].mxu0
    %v252 = vadd.f32 0.0, %v251
    %v253 = vpop.f32.mrb[0].mxu0
    %v254 = vpop.f32.mrb[0].mxu0
    %255 = vdwg.mxu0
    %v256 = vld [vmem:[%s2] sm:$0xff]
    %v257 = vld [vmem:[%s2 + $0x8] sm:$0xff]
    %vm258 = vcmp.ge.s32.totalorder %v256, 0
    %vm259 = vcmp.ge.s32.totalorder %v257, 0
    %v260 = vmul.f32 %v250, 2.0
    %v261 = vmul.f32 %v252, 2.0
    %v262 = vsel %vm258, %v260, 0.0
    %v263 = vsel %vm259, %v261, 0.0
    %264 = vst [vmem:[#allocation2] sm:$0xff] %v262
    %265 = vst [vmem:[#allocation2 + $0x8] sm:$0xff] %v263
    // Predicated region
    $region14: #{functional_model_forward.11} parent=1 // pred_check
      _
    $region15: #{functional_model_forward.11} parent=1 // pred_check_branch
      %267 = sbr.rel (0) target = $region17
    $region16: #{functional_model_forward.11} parent=1 // pred_region
      %s269 = ssub.s32 256, 256
      %270 = vsyncadd [#allocation3], %s269
      %s272 = sshll.u32 [#allocation2], 4
      %s273 = int_to_ptr.vmem [resolvable:$true] %s272
      %275 = dma.vmem_to_hbm [thread:$0]  %s273, 256, %s3, [#allocation3]
    $region17: #{functional_model_forward.11} parent=1 // pred_fallthru
      _
    // Predicated region
    $region18: #{functional_model_forward.11} parent=1 // pred_check
      _
    $region19: #{functional_model_forward.11} parent=1 // pred_check_branch
      %277 = sbr.rel (0) target = $region21
    $region20: #{functional_model_forward.11} parent=1 // pred_region
      %278 = dma.done [#allocation3], 256
    $region21: #{functional_model_forward.11} parent=1 // pred_fallthru
      _
    %279 = vsyncpa [#allocation3], 1

</llo_original>
